<compile_context>
chip_gen: v5e
topology: v5e:2x2
jax: 0.10.0
libtpu: 0.0.40
codegen_flags: <defaults>
</compile_context>

<pallas_src>
import functools
import math

import jax
import jax.numpy as jnp
from jax import lax
from jax.experimental import pallas as pl
from jax.experimental.pallas import tpu as pltpu


def _round_up(x, m):
    return (x + m - 1) // m * m


def _embed_kernel(ids_ref, emb_hbm, pe_ref, *rest, scale, tr, training):
    """One grid step = one tile of `tr` flattened tokens.

    ids_ref   : (N_pad,) int32 SMEM   (scalar-prefetched, clamped token ids)
    emb_hbm   : (V, D)   f32   HBM    (raw ref, memory_space=pl.ANY)
    pe_ref    : (tr, D)  f32   VMEM   (positional-encoding rows for this tile)
    mask_ref  : (tr, D)  f32   VMEM   (training only: 0 or 1/keep)
    out_ref   : (tr, D)  f32   VMEM
    gather_buf: (tr, D)  f32   VMEM scratch (DMA-gather landing buffer)
    sem       : (1,)     DMA semaphore shared by all row copies of the tile
    """
    if training:
        mask_ref, out_ref, gather_buf, sem = rest
    else:
        mask_ref = None
        out_ref, gather_buf, sem = rest

    i = pl.program_id(0)
    base = i * tr

    # 1) Issue one row-gather DMA per token: emb_hbm[ids[base+r]] -> gather_buf[r].
    def _issue(r, carry):
        tok = ids_ref[base + r]
        pltpu.make_async_copy(
            emb_hbm.at[pl.ds(tok, 1)],        # (1, D) row in HBM
            gather_buf.at[pl.ds(r, 1)],       # (1, D) row in VMEM
            sem.at[0],
        ).start()
        return carry

    lax.fori_loop(0, tr, _issue, 0)

    # 2) Wait for all `tr` row copies (matching descriptors on the shared sem).
    def _wait(r, carry):
        pltpu.make_async_copy(
            emb_hbm.at[pl.ds(0, 1)],          # dummy src: only the shape matters
            gather_buf.at[pl.ds(r, 1)],
            sem.at[0],
        ).wait()
        return carry

    lax.fori_loop(0, tr, _wait, 0)

    # 3) Scale and add the positional encoding.
    x = gather_buf[...] * scale + pe_ref[...]

    # 4) Dropout (training only): multiply by the precomputed 0 / (1/keep) mask.
    if training:
        x = x * mask_ref[...]

    out_ref[...] = x.astype(out_ref.dtype)


def make_positional_encoding(d_model, max_len=5000):
    position = jnp.arange(max_len, dtype=jnp.float32)[:, None]
    div_term = jnp.exp(jnp.arange(0, d_model, 2, dtype=jnp.float32)
                       * (-math.log(10000.0) / d_model))
    pe = jnp.zeros((max_len, d_model), dtype=jnp.float32)
    pe = pe.at[:, 0::2].set(jnp.sin(position * div_term))
    pe = pe.at[:, 1::2].set(jnp.cos(position * div_term))
    return pe                                                 # (max_len, d_model)


def transformer_embedding(ids, emb_table, pe_table, *,
                          dropout_p=0.1, training=False, rng_key=None):
    """ids: (B, S) int; emb_table: (V, D) f32; pe_table: (max_len, D) f32."""
    B, S = ids.shape
    V, D = emb_table.shape
    N = B * S
    scale = math.sqrt(D)

    # Row tile: 256 tokens per grid step (or the whole padded problem if smaller).
    tr = min(256, _round_up(N, 8))
    n_pad = _round_up(N, tr)
    num_tiles = n_pad // tr

    # Clamp ids so the DMA gather stays in bounds (torch.nn.Embedding would
    # raise on OOB ids; a manual DMA has no runtime bounds check).
    ids_flat = jnp.clip(ids.reshape(N).astype(jnp.int32), 0, V - 1)
    ids_flat = jnp.pad(ids_flat, (0, n_pad - N))

    # Per-token PE rows (position = token index within its sequence), padded.
    pe_rows = jnp.broadcast_to(pe_table[:S][None].astype(jnp.float32),
                               (B, S, D)).reshape(N, D)
    pe_rows = jnp.pad(pe_rows, ((0, n_pad - N), (0, 0)))

    apply_dropout = bool(training) and float(dropout_p) > 0.0

    inputs = [ids_flat, emb_table.astype(jnp.float32), pe_rows]
    in_specs = [
        pl.BlockSpec(memory_space=pl.ANY),                        # table in HBM
        pl.BlockSpec((tr, D), lambda i, ids: (i, 0)),             # PE rows
    ]

    if apply_dropout:
        if rng_key is None:
            rng_key = jax.random.PRNGKey(0)
        keep = 1.0 - float(dropout_p)
        keep_mask = jax.random.bernoulli(rng_key, p=keep, shape=(n_pad, D))
        drop_mask = keep_mask.astype(jnp.float32) * jnp.float32(1.0 / keep)
        inputs.append(drop_mask)
        in_specs.append(pl.BlockSpec((tr, D), lambda i, ids: (i, 0)))

    kernel = functools.partial(_embed_kernel, scale=scale, tr=tr,
                               training=apply_dropout)

    out = pl.pallas_call(
        kernel,
        out_shape=jax.ShapeDtypeStruct((n_pad, D), jnp.float32),
        grid_spec=pltpu.PrefetchScalarGridSpec(
            num_scalar_prefetch=1,                  # token ids -> SMEM
            grid=(num_tiles,),
            in_specs=in_specs,
            out_specs=pl.BlockSpec((tr, D), lambda i, ids: (i, 0)),
            scratch_shapes=[
                pltpu.VMEM((tr, D), jnp.float32),   # gather landing buffer
                pltpu.SemaphoreType.DMA((1,)),      # shared row-copy semaphore
            ],
        ),
        compiler_params=pltpu.CompilerParams(
            dimension_semantics=("parallel",)),     # tiles are independent
    )(*inputs)

    return out[:N].reshape(B, S, D)


if __name__ == "__main__":
    # small, deterministic setup
    vocab_size = 64
    d_model = 128          # multiple of 128 -> lane-dense (Tr, D) blocks
    max_len = 64
    batch, seq = 2, 8

    key = jax.random.PRNGKey(0)
    k_emb, k_ids = jax.random.split(key)

    # nn.Embedding default init: N(0, 1)
    emb_table = jax.random.normal(k_emb, (vocab_size, d_model), dtype=jnp.float32)
    pe_table = make_positional_encoding(d_model, max_len)
    ids = jax.random.randint(k_ids, (batch, seq), 0, vocab_size, dtype=jnp.int32)

    # eval mode (dropout = identity): must match the pure-JAX reference exactly.
    out = transformer_embedding(ids, emb_table, pe_table,
                                dropout_p=0.1, training=False)
    out = jax.block_until_ready(out)

    ref = emb_table[ids] * math.sqrt(d_model) + pe_table[:seq][None]
    assert out.shape == (batch, seq, d_model)
    assert jnp.allclose(out, ref, atol=1e-5, rtol=1e-5)

    # training mode: exercise the dropout path (mask cannot bit-match torch's
    # RNG; kept values must equal ref / keep, dropped values must be 0).
    out_tr = transformer_embedding(ids, emb_table, pe_table,
                                   dropout_p=0.1, training=True,
                                   rng_key=jax.random.PRNGKey(1234))
    out_tr = jax.block_until_ready(out_tr)
    assert out_tr.shape == (batch, seq, d_model)
    assert bool(jnp.all(jnp.isfinite(out_tr)))
    kept = out_tr != 0.0
    assert bool(jnp.allclose(jnp.where(kept, out_tr, 0.0),
                             jnp.where(kept, ref / 0.9, 0.0),
                             atol=1e-4, rtol=1e-4))

    print("KERNEL_OK")
</pallas_src>

<mosaic_0001>
module attributes {stable_mosaic.version = 11 : i64} {
  func.func @_embed_kernel(%arg0: i32, %arg1: memref<16xi32, #tpu.memory_space<smem>>, %arg2: memref<64x128xf32, #tpu.memory_space<any>>, %arg3: memref<16x128xf32, #tpu.memory_space<vmem>>, %arg4: memref<16x128xf32, #tpu.memory_space<vmem>>, %arg5: memref<16x128xf32, #tpu.memory_space<vmem>>, %arg6: memref<1x!tpu.dma_semaphore, #tpu.memory_space<semaphore_mem>>) attributes {dimension_semantics = [#tpu.dimension_semantics<parallel>], iteration_bounds = array<i64: 1>, scalar_prefetch = 1 : i64, scratch_operands = 2 : i64, tpu.core_type = #tpu.core_type<tc>, window_params = [{}, {transform_indices = @transform_1, window_bounds = array<i64: 16, 128>}, {transform_indices = @transform_2, window_bounds = array<i64: 16, 128>}]} {
    %c16_i32 = arith.constant 16 : i32
    %0 = arith.muli %arg0, %c16_i32 : i32
    %c0_i32 = arith.constant 0 : i32
    %c16_i32_0 = arith.constant 16 : i32
    %1 = arith.addi %c0_i32, %c16_i32_0 : i32
    %c1_i32 = arith.constant 1 : i32
    scf.for %arg7 = %c0_i32 to %1 step %c1_i32  : i32 {
      %9 = arith.addi %0, %arg7 : i32
      %10 = arith.index_cast %9 : i32 to index
      %11 = memref.load %arg1[%10] : memref<16xi32, #tpu.memory_space<smem>>
      %c0_i32_11 = arith.constant 0 : i32
      %c0_i32_12 = arith.constant 0 : i32
      %12 = tpu.memref_slice %arg2[%11, %c0_i32_12] : memref<64x128xf32, #tpu.memory_space<any>> -> memref<1x128xf32, #tpu.memory_space<any>>
      %c0_i32_13 = arith.constant 0 : i32
      %13 = tpu.memref_slice %arg5[%arg7, %c0_i32_13] : memref<16x128xf32, #tpu.memory_space<vmem>> -> memref<1x128xf32, #tpu.memory_space<vmem>>
      %14 = tpu.memref_slice %arg6[%c0_i32_11] : memref<1x!tpu.dma_semaphore, #tpu.memory_space<semaphore_mem>> -> memref<1x!tpu.dma_semaphore, #tpu.memory_space<semaphore_mem>>
      %15 = tpu.memref_squeeze %14 : memref<1x!tpu.dma_semaphore, #tpu.memory_space<semaphore_mem>> -> memref<!tpu.dma_semaphore, #tpu.memory_space<semaphore_mem>>
      tpu.enqueue_dma source(%12 : memref<1x128xf32, #tpu.memory_space<any>>) target(%13 : memref<1x128xf32, #tpu.memory_space<vmem>>) target_semaphore(%15 : memref<!tpu.dma_semaphore, #tpu.memory_space<semaphore_mem>>)
    }
    %c16_i32_1 = arith.constant 16 : i32
    %c0_i32_2 = arith.constant 0 : i32
    %c16_i32_3 = arith.constant 16 : i32
    %2 = arith.addi %c0_i32_2, %c16_i32_3 : i32
    %c1_i32_4 = arith.constant 1 : i32
    scf.for %arg7 = %c0_i32_2 to %2 step %c1_i32_4  : i32 {
      %c0_i32_11 = arith.constant 0 : i32
      %c0_i32_12 = arith.constant 0 : i32
      %c0_i32_13 = arith.constant 0 : i32
      %9 = tpu.memref_slice %arg2[%c0_i32_12, %c0_i32_13] : memref<64x128xf32, #tpu.memory_space<any>> -> memref<1x128xf32, #tpu.memory_space<any>>
      %c0_i32_14 = arith.constant 0 : i32
      %10 = tpu.memref_slice %arg5[%arg7, %c0_i32_14] : memref<16x128xf32, #tpu.memory_space<vmem>> -> memref<1x128xf32, #tpu.memory_space<vmem>>
      %11 = tpu.memref_slice %arg6[%c0_i32_11] : memref<1x!tpu.dma_semaphore, #tpu.memory_space<semaphore_mem>> -> memref<1x!tpu.dma_semaphore, #tpu.memory_space<semaphore_mem>>
      %12 = tpu.memref_squeeze %11 : memref<1x!tpu.dma_semaphore, #tpu.memory_space<semaphore_mem>> -> memref<!tpu.dma_semaphore, #tpu.memory_space<semaphore_mem>>
      tpu.wait_dma2 semaphore(%12 : memref<!tpu.dma_semaphore, #tpu.memory_space<semaphore_mem>>) src(%9 : memref<1x128xf32, #tpu.memory_space<any>>) dst(%10 : memref<1x128xf32, #tpu.memory_space<vmem>>)
    }
    %c16_i32_5 = arith.constant 16 : i32
    %c0 = arith.constant 0 : index
    %c0_6 = arith.constant 0 : index
    %3 = vector.load %arg5[%c0, %c0_6] : memref<16x128xf32, #tpu.memory_space<vmem>>, vector<16x128xf32>
    %cst = arith.constant 11.3137083 : f32
    %4 = vector.broadcast %cst : f32 to vector<16x128xf32>
    %5 = arith.mulf %3, %4 : vector<16x128xf32>
    %c0_7 = arith.constant 0 : index
    %c0_8 = arith.constant 0 : index
    %6 = vector.load %arg3[%c0_7, %c0_8] : memref<16x128xf32, #tpu.memory_space<vmem>>, vector<16x128xf32>
    %7 = arith.addf %5, %6 : vector<16x128xf32>
    %c0_9 = arith.constant 0 : index
    %c0_10 = arith.constant 0 : index
    %8 = vector.load %arg4[%c0_9, %c0_10] : memref<16x128xf32, #tpu.memory_space<vmem>>, vector<16x128xf32>
    tpu.vector_store %arg4[%c0_9, %c0_10], %7 {strides = array<i32>} : memref<16x128xf32, #tpu.memory_space<vmem>>, vector<16x128xf32>,
    return
  }
  func.func @transform_1(%arg0: i32, %arg1: memref<16xi32, #tpu.memory_space<smem>>) -> (i32, i32) {
    %c0_i32 = arith.constant 0 : i32
    %c0_i32_0 = arith.constant 0 : i32
    return %arg0, %c0_i32 : i32, i32
  }
  func.func @transform_2(%arg0: i32, %arg1: memref<16xi32, #tpu.memory_space<smem>>) -> (i32, i32) {
    %c0_i32 = arith.constant 0 : i32
    %c0_i32_0 = arith.constant 0 : i32
    return %arg0, %c0_i32 : i32, i32
  }
}

</mosaic_0001>

<llo_original>
// kernel: tpu_custom_call.1
$region0: #{tpu_custom_call.1}
  #allocation0 [shape = 'u32[]', space=smem, size = 0x4, offset = 0x4, fixed_abs, tag = 'smem constant byte address 0x4 - core index']
  #allocation1 [shape = 'u32[72,128]{1,0:T(1,128)}', space=vmem, size = 0x9000, scoped, tag = 'internal scratch']
  #allocation2 [shape = 'f32[16,128]{1,0:T(8,128)}', space=vmem, size = 0x2000, scoped, tag = 'scratch operand']
  #allocation3 [shape = 's32[1]{0}', space=sflag, size = 0x4, scoped, tag = 'scratch operand']
  #allocation4 [shape = 's32[1]{0}', space=sflag, size = 0x4, scoped, tag = 'scoped memory for tpu_custom_call.1']
  #allocation5 [shape = 'u8[512]{0}', space=smem, size = 0x200, scoped, tag = 'prefetched SMEM operand 0']
  #allocation10 [shape = 's32[]', space=sflag, size = 0x4, offset = 0, fixed_abs, tag = 'sflag constant byte address 0x0 - dummy sync flag']
  #allocation11 [shape = 's32[]', space=sflag, size = 0x4, offset = 0, fixed_abs, tag = 'sflag constant byte address 0x0 - dummy sync flag']
  #allocation12 [shape = 'u32[]', space=smem, size = 0x4, offset = 0x44, fixed_abs, tag = 'smem constant byte address 0x44 - assertion arg 0']
  #allocation13 [shape = 'u32[]', space=smem, size = 0x4, offset = 0x48, fixed_abs, tag = 'smem constant byte address 0x48 - assertion arg 1']
  %s0 = inlined_call_operand.hbm [shape: s32[16], index: 0, kind: input, shape index: {}]
  %s1 = inlined_call_operand.hbm [shape: f32[64,128], index: 1, kind: input, shape index: {}]
  %s2 = inlined_call_operand.hbm [shape: f32[16,128], index: 2, kind: input, shape index: {}]
  %s3 = inlined_call_operand.hbm [shape: f32[16,128], index: 3, kind: output, shape index: {}]
  %s4 = sld [smem:[#allocation0]]
  $region36: #{tpu_custom_call.1} parent=0
    _
  %s6 = ssub.s32 1, %s4
  %s7 = scalar_select 0, %s6, %s4
  %s9 = sshll.u32 %s0, 4
  %s10 = int_to_ptr.hbm [resolvable:$true] %s9
  %12 = dma.hbm_to_smem %s10, 16, [#allocation5], [#allocation4]
  %14 = dma.done [#allocation4], 16
  %15 = sfence
  $region1: #{tpu_custom_call.1} parent=0
    #allocation6 [shape = 'u8[8192]{0}', space=vmem, size = 0x2000, scoped, tag = 'input window, operand 2, single buffered']
    #allocation7 [shape = 's32[1]{0}', space=sflag, size = 0x4, scoped, tag = 'scoped memory for tpu_custom_call.1']
    #allocation8 [shape = 's32[1]{0}', space=sflag, size = 0x4, scoped, tag = 'scoped memory for tpu_custom_call.1']
    #allocation9 [shape = 'u8[8192]{0}', space=vmem, size = 0x2000, scoped, tag = 'output window, operand 0, single buffered']
    %16 = vsyncpa [#allocation7], 0
    %17 = vsyncpa [#allocation8], 0
    // Predicated region
    $region2: #{tpu_custom_call.1} parent=1 // pred_check
      _
    $region3: #{tpu_custom_call.1} parent=1 // pred_check_branch
      %19 = sbr.rel (0) target = $region5
    $region4: #{tpu_custom_call.1} parent=1 // pred_region
      %21 = vsyncadd [#allocation7], 0
      %s22 = sshll.u32 %s2, 4
      %s23 = int_to_ptr.hbm [resolvable:$true] %s22
      %s24 = sshll.u32 [#allocation6], 4
      %s25 = int_to_ptr.vmem [resolvable:$true] %s24
      %30 = dma.hbm_to_vmem [thread:$0]  %s23, 256, %s25, [#allocation7], 128, 128, 8
    $region5: #{tpu_custom_call.1} parent=1 // pred_fallthru
      _
    // Predicated region
    $region6: #{tpu_custom_call.1} parent=1 // pred_check
      _
    $region7: #{tpu_custom_call.1} parent=1 // pred_check_branch
      %32 = sbr.rel (0) target = $region9
    $region8: #{tpu_custom_call.1} parent=1 // pred_region
      %34 = dma.done [#allocation7], 256
    $region9: #{tpu_custom_call.1} parent=1 // pred_fallthru
      _
    %s35 = smul.u32 0, 16
    loop: start=0, step=1, limit=16
    $region10: #{tpu_custom_call.1} parent=1 // loop_pre_header
      _
    $region11: #{tpu_custom_call.1} parent=1 // loop_header
      %s37 = sphi 0, %s41
      %p38 = scmp.ge.s32.totalorder %s37, 16
    $region12: #{tpu_custom_call.1} parent=1 // loop_header_branch
      %40 = sbr.rel (%p38) target = $region16
    $region13: #{tpu_custom_call.1} parent=1 // loop_body
      %s42 = sadd.s32 %s35, %s37
      %s43 = sld [smem:[#allocation5 + %s42]]
      %s44 = scalar_lea.hbm %s1, %s43
      %s45 = scalar_lea.vmem [#allocation2], %s37
      // Predicated region
      $region17: #{tpu_custom_call.1} parent=13 // pred_check
        _
      $region18: #{tpu_custom_call.1} parent=13 // pred_check_branch
        %47 = sbr.rel target = $region20
      $region19: #{tpu_custom_call.1} parent=13 // pred_region
        %48 = sst [smem:[#allocation12]] [#allocation11]
        %49 = sst [smem:[#allocation13]] [#allocation10]
      $region20: #{tpu_custom_call.1} parent=13 // pred_fallthru
        _
      %51 = shalt.err (0)
      %s53 = sshll.u32 %s44, 4
      %s54 = int_to_ptr.hbm [resolvable:$true] %s53
      %s55 = sshll.u32 %s45, 4
      %s56 = int_to_ptr.vmem [resolvable:$true] %s55
      %58 = dma.hbm_to_vmem [thread:$0]  %s54, 16, %s56, [#allocation3]
    $region14: #{tpu_custom_call.1} parent=1 // loop_footer
      %s41 = sadd.s32 1, %s37
    $region15: #{tpu_custom_call.1} parent=1 // loop_footer_branch
      %36 = sbr.rel target = $region11
    $region16: #{tpu_custom_call.1} parent=1 // loop_exit
      _
    loop: start=0, step=1, limit=16
    $region21: #{tpu_custom_call.1} parent=1 // loop_pre_header
      _
    $region22: #{tpu_custom_call.1} parent=1 // loop_header
      %s60 = sphi 0, %s64
      %p61 = scmp.ge.s32.totalorder %s60, 16
    $region23: #{tpu_custom_call.1} parent=1 // loop_header_branch
      %63 = sbr.rel (%p61) target = $region27
    $region24: #{tpu_custom_call.1} parent=1 // loop_body
      %s65 = smul.u32 1, 1
      %s66 = sshll.u32 %s65, 4
      %67 = dma.done [#allocation3], %s66
    $region25: #{tpu_custom_call.1} parent=1 // loop_footer
      %s64 = sadd.s32 1, %s60
    $region26: #{tpu_custom_call.1} parent=1 // loop_footer_branch
      %59 = sbr.rel target = $region22
    $region27: #{tpu_custom_call.1} parent=1 // loop_exit
      _
    %v68 = vld [vmem:[#allocation2] sm:$0xff]
    %v69 = vld [vmem:[#allocation2 + $0x8] sm:$0xff]
    %v70 = vmul.f32 %v68, 11.313708
    %v71 = vmul.f32 %v69, 11.313708
    %v72 = vld [vmem:[#allocation6] sm:$0xff]
    %v73 = vld [vmem:[#allocation6 + $0x8] sm:$0xff]
    %v74 = vadd.f32 %v70, %v72
    %v75 = vadd.f32 %v71, %v73
    %76 = vst [vmem:[#allocation9] sm:$0xff] %v74
    %77 = vst [vmem:[#allocation9 + $0x8] sm:$0xff] %v75
    // Predicated region
    $region28: #{tpu_custom_call.1} parent=1 // pred_check
      _
    $region29: #{tpu_custom_call.1} parent=1 // pred_check_branch
      %79 = sbr.rel (0) target = $region31
    $region30: #{tpu_custom_call.1} parent=1 // pred_region
      %81 = vsyncadd [#allocation8], 0
      %s82 = sshll.u32 [#allocation9], 4
      %s83 = int_to_ptr.vmem [resolvable:$true] %s82
      %s84 = sshll.u32 %s3, 4
      %s85 = int_to_ptr.hbm [resolvable:$true] %s84
      %90 = dma.vmem_to_hbm [thread:$0]  %s83, 256, %s85, [#allocation8], 128, 128, 8
    $region31: #{tpu_custom_call.1} parent=1 // pred_fallthru
      _
    // Predicated region
    $region32: #{tpu_custom_call.1} parent=1 // pred_check
      _
    $region33: #{tpu_custom_call.1} parent=1 // pred_check_branch
      %92 = sbr.rel (0) target = $region35
    $region34: #{tpu_custom_call.1} parent=1 // pred_region
      %94 = dma.done [#allocation8], 256
    $region35: #{tpu_custom_call.1} parent=1 // pred_fallthru
      _
    %95 = vsyncpa [#allocation7], 1
    %96 = vsyncpa [#allocation8], 1
  %97 = vsyncmov [#allocation3]
  %s98 = vpop.sfrf %97
  %p99 = scmp.eq.s32.totalorder %s98, 0
  %p100 = pneg %p99
  %102 = shalt.err (%p100)

</llo_original>
